<compile_context>
chip_gen: v7x
topology: tpu7x:2x2x1
jax: 0.10.0
libtpu: 0.0.40
codegen_flags: <defaults>
</compile_context>

<pallas_src>
import functools

import jax
import jax.numpy as jnp
from jax.experimental import pallas as pl
from jax.experimental.pallas import tpu as pltpu


_TARGET_BLOCK_BYTES = 4 * 1024 * 1024   # ~4 MiB per image block
_TINY_BYTES = 1 << 20                   # below this, plain jnp is already optimal
_VMEM_FLOOR = 16 << 20
_VMEM_CEIL = 32 << 20                   # sized for v7x (64 MiB physical / TC)
_MIN_GRID_STEPS = 2                     # let both v7x TensorCores get a block


def _pick_tile(dim: int, quantum: int, max_tile: int) -> int:
    """Largest multiple of `quantum` that divides `dim` and is <= max_tile.

    `dim` must already be a multiple of `quantum` (callers pad first).
    Always returns at least `quantum`.
    """
    assert dim % quantum == 0 and dim >= quantum
    t = min(max_tile, dim)
    t = (t // quantum) * quantum
    while t >= quantum:
        if dim % t == 0:
            return t
        t -= quantum
    return quantum


def _choose_blocks(b_pad: int, m_pad: int, itemsize: int, sublane_q: int):
    """Pick (bB, bM) giving contiguous-ish blocks of ~_TARGET_BLOCK_BYTES."""
    row_bytes = m_pad * itemsize
    if sublane_q * row_bytes <= _TARGET_BLOCK_BYTES:
        # Full-row lane tile: each (bB, M) block is one contiguous HBM region,
        # and the trigger is a single DMA for the whole kernel.
        bm = m_pad
    else:
        max_lane = max(128, (_TARGET_BLOCK_BYTES // sublane_q) // itemsize)
        bm = _pick_tile(m_pad, 128, max_lane)

    max_rows = max(sublane_q, _TARGET_BLOCK_BYTES // (bm * itemsize))
    bb = _pick_tile(b_pad, sublane_q, max_rows)

    # v7x megacore: make sure there are >= _MIN_GRID_STEPS grid steps whenever
    # the data can actually be split (both axes are "parallel").
    while (b_pad // bb) * (m_pad // bm) < _MIN_GRID_STEPS:
        if bb > sublane_q:
            bb = _pick_tile(b_pad, sublane_q, bb - sublane_q)
        elif bm > 128:
            bm = _pick_tile(m_pad, 128, bm - 128)
        else:
            break
    return bb, bm


def _make_blend_kernel(alpha: float, out_is_int: bool, int_min: float, int_max: float):
    def blend_kernel(img_ref, trig_ref, out_ref):
        # img_ref:  (bB, bM) block of flattened images
        # trig_ref: (1,  bM) matching lane-tile of the flattened trigger
        img = img_ref[...].astype(jnp.float32)
        trig = trig_ref[...].astype(jnp.float32)
        out = img + alpha * (trig - img)        # == (1-alpha)*img + alpha*trig
        if out_is_int:
            out = jnp.clip(jnp.round(out), int_min, int_max)
        out_ref[...] = out.astype(out_ref.dtype)

    return blend_kernel


@functools.partial(jax.jit, static_argnames=("alpha", "force_pallas"))
def whole_blended_trigger(img_nchw: jax.Array, trigger_chw: jax.Array,
                          alpha: float, force_pallas: bool = False):
    """Blend a batch of NCHW images with a single CHW trigger image."""
    B, C, H, W = img_nchw.shape
    assert trigger_chw.shape == (C, H, W)
    dtype = img_nchw.dtype
    itemsize = dtype.itemsize

    total_bytes = img_nchw.size * itemsize
    if (not force_pallas) and total_bytes < _TINY_BYTES:
        # Launch + pipeline setup dominates tiny elementwise ops; let XLA fuse it.
        out = (img_nchw.astype(jnp.float32)
               + alpha * (trigger_chw[None].astype(jnp.float32)
                          - img_nchw.astype(jnp.float32)))
        if jnp.issubdtype(dtype, jnp.integer):
            info = jnp.iinfo(dtype)
            out = jnp.clip(jnp.round(out), info.min, info.max)
        return out.astype(dtype)

    M = C * H * W
    img2d = img_nchw.reshape(B, M)            # lane-dense: last dim = C*H*W
    trig2d = trigger_chw.reshape(1, M)

    # dtype-dependent tile quanta: native packed tiles are (8,128) f32,
    # (16,128) bf16, (32,128) int8/uint8.
    sublane_q = 8 * max(1, 4 // itemsize)

    # Pad ragged dims instead of falling back to full-dim tiles (which could
    # blow the VMEM limit for large ragged batches).
    B_pad = ((B + sublane_q - 1) // sublane_q) * sublane_q
    M_pad = ((M + 127) // 128) * 128
    if B_pad != B or M_pad != M:
        img2d = jnp.pad(img2d, ((0, B_pad - B), (0, M_pad - M)))
        trig2d = jnp.pad(trig2d, ((0, 0), (0, M_pad - M)))

    bB, bM = _choose_blocks(B_pad, M_pad, itemsize, sublane_q)
    n_lane_tiles = M_pad // bM
    n_batch_tiles = B_pad // bB

    # Explicit VMEM budget: in + out blocks double-buffered, plus the trigger
    # tile (double-buffered) and slack; clamp to <= 32 MiB for v7x headroom.
    img_block_bytes = bB * bM * itemsize
    trig_block_bytes = bM * itemsize
    vmem_needed = 2 * (2 * img_block_bytes + trig_block_bytes) + (4 << 20)
    vmem_limit = int(min(max(vmem_needed, _VMEM_FLOOR), _VMEM_CEIL))

    out_is_int = bool(jnp.issubdtype(dtype, jnp.integer))
    if out_is_int:
        info = jnp.iinfo(dtype)
        int_min, int_max = float(info.min), float(info.max)
    else:
        int_min, int_max = 0.0, 0.0

    out2d = pl.pallas_call(
        _make_blend_kernel(float(alpha), out_is_int, int_min, int_max),
        out_shape=jax.ShapeDtypeStruct((B_pad, M_pad), dtype),
        grid_spec=pltpu.PrefetchScalarGridSpec(
            num_scalar_prefetch=0,
            # Lane-tile axis OUTER, batch-tile axis INNER: the trigger block
            # index is constant across the inner axis, so it is fetched once
            # per lane tile (once total when bM == M_pad).
            grid=(n_lane_tiles, n_batch_tiles),
            in_specs=[
                pl.BlockSpec((bB, bM), lambda j, b: (b, j)),   # images
                pl.BlockSpec((1, bM), lambda j, b: (0, j)),    # trigger
            ],
            out_specs=pl.BlockSpec((bB, bM), lambda j, b: (b, j)),
        ),
        compiler_params=pltpu.CompilerParams(
            dimension_semantics=("parallel", "parallel"),
            vmem_limit_bytes=vmem_limit,
        ),
    )(img2d, trig2d)

    if B_pad != B or M_pad != M:
        out2d = out2d[:B, :M]
    return out2d.reshape(B, C, H, W)


def _reference(img, trigger, alpha):
    return (img.astype(jnp.float32) * (1.0 - alpha)
            + trigger[None].astype(jnp.float32) * alpha).astype(img.dtype)


if __name__ == "__main__":
    key = jax.random.PRNGKey(0)
    k1, k2, k3, k4, k5, k6 = jax.random.split(key, 6)

    alpha = 0.2

    # --- Small test (module-consistent shapes: input_size=16, RGB) -----------
    B, C, H, W = 2, 3, 16, 16
    img = jax.random.uniform(k1, (B, C, H, W), dtype=jnp.float32)
    trigger = jax.random.uniform(k2, (C, H, W), dtype=jnp.float32)
    out = jax.block_until_ready(whole_blended_trigger(img, trigger, alpha,
                                                      force_pallas=True))
    ref = _reference(img, trigger, alpha)
    assert out.shape == (B, C, H, W)
    assert jnp.allclose(out, ref, atol=1e-6, rtol=1e-6)

    # --- Larger test: exercises the full-row / multi-step tiling path --------
    B2, C2, H2, W2 = 8, 3, 64, 64
    img2 = jax.random.uniform(k3, (B2, C2, H2, W2), dtype=jnp.float32)
    trigger2 = jax.random.uniform(k4, (C2, H2, W2), dtype=jnp.float32)
    out2 = jax.block_until_ready(whole_blended_trigger(img2, trigger2, alpha,
                                                       force_pallas=True))
    ref2 = _reference(img2, trigger2, alpha)
    assert out2.shape == (B2, C2, H2, W2)
    assert jnp.allclose(out2, ref2, atol=1e-6, rtol=1e-6)

    # --- Ragged batch test: exercises the padding path (B=5 not mult of 8) ---
    B3, C3, H3, W3 = 5, 3, 32, 32
    img3 = jax.random.uniform(k5, (B3, C3, H3, W3), dtype=jnp.float32)
    trigger3 = jax.random.uniform(k6, (C3, H3, W3), dtype=jnp.float32)
    out3 = jax.block_until_ready(whole_blended_trigger(img3, trigger3, alpha,
                                                       force_pallas=True))
    ref3 = _reference(img3, trigger3, alpha)
    assert out3.shape == (B3, C3, H3, W3)
    assert jnp.allclose(out3, ref3, atol=1e-6, rtol=1e-6)

    print("KERNEL_OK")
</pallas_src>

<mosaic_0001>
module attributes {stable_mosaic.version = 11 : i64} {
  func.func @blend_kernel(%arg0: i32, %arg1: i32, %arg2: memref<8x384xf32, #tpu.memory_space<vmem>>, %arg3: memref<1x384xf32, #tpu.memory_space<vmem>>, %arg4: memref<8x384xf32, #tpu.memory_space<vmem>>) attributes {dimension_semantics = [#tpu.dimension_semantics<parallel>, #tpu.dimension_semantics<parallel>], iteration_bounds = array<i64: 2, 1>, scalar_prefetch = 0 : i64, scratch_operands = 0 : i64, tpu.core_type = #tpu.core_type<tc>, window_params = [{transform_indices = @transform_0, window_bounds = array<i64: 8, 384>}, {transform_indices = @transform_1, window_bounds = array<i64: 1, 384>}, {transform_indices = @transform_2, window_bounds = array<i64: 8, 384>}]} {
    %c0 = arith.constant 0 : index
    %c0_0 = arith.constant 0 : index
    %0 = vector.load %arg2[%c0, %c0_0] : memref<8x384xf32, #tpu.memory_space<vmem>>, vector<8x384xf32>
    %c0_1 = arith.constant 0 : index
    %c0_2 = arith.constant 0 : index
    %1 = vector.load %arg3[%c0_1, %c0_2] : memref<1x384xf32, #tpu.memory_space<vmem>>, vector<1x384xf32>
    %2 = vector.broadcast %1 : vector<1x384xf32> to vector<8x384xf32>
    %3 = arith.subf %2, %0 : vector<8x384xf32>
    %cst = arith.constant 2.000000e-01 : f32
    %4 = vector.broadcast %cst : f32 to vector<8x384xf32>
    %5 = arith.mulf %4, %3 : vector<8x384xf32>
    %6 = arith.addf %0, %5 : vector<8x384xf32>
    %c0_3 = arith.constant 0 : index
    %c0_4 = arith.constant 0 : index
    %7 = vector.load %arg4[%c0_3, %c0_4] : memref<8x384xf32, #tpu.memory_space<vmem>>, vector<8x384xf32>
    tpu.vector_store %arg4[%c0_3, %c0_4], %6 {strides = array<i32>} : memref<8x384xf32, #tpu.memory_space<vmem>>, vector<8x384xf32>,
    return
  }
  func.func @transform_0(%arg0: i32, %arg1: i32) -> (i32, i32) {
    %c0_i32 = arith.constant 0 : i32
    return %arg1, %arg0 : i32, i32
  }
  func.func @transform_1(%arg0: i32, %arg1: i32) -> (i32, i32) {
    %c0_i32 = arith.constant 0 : i32
    %c0_i32_0 = arith.constant 0 : i32
    return %c0_i32, %arg0 : i32, i32
  }
  func.func @transform_2(%arg0: i32, %arg1: i32) -> (i32, i32) {
    %c0_i32 = arith.constant 0 : i32
    return %arg1, %arg0 : i32, i32
  }
}

</mosaic_0001>

<llo_original>
// kernel: whole_blended_trigger.1
$region0: #{whole_blended_trigger.1}
  #allocation0 [shape = 'u32[]', space=smem, size = 0x4, offset = 0x4, fixed_abs, tag = 'smem constant byte address 0x4 - core index']
  #allocation1 [shape = 'u32[144,128]{1,0:T(1,128)}', space=vmem, size = 0x12000, scoped, tag = 'internal scratch']
  %s0 = inlined_call_operand.vmem [shape: f32[8,768], index: 0, kind: input, shape index: {}]
  %s1 = inlined_call_operand.vmem [shape: f32[1,768], index: 1, kind: input, shape index: {}]
  %s2 = inlined_call_operand.vmem [shape: f32[8,768], index: 2, kind: output, shape index: {}]
  %s3 = sld [smem:[#allocation0]]
  $region41: #{whole_blended_trigger.1} parent=0
    _
  %s5 = ssub.s32 1, %s3
  %s6 = scalar_select 0, %s5, %s3
  loop: start=0, step=1, limit=4
  $region2: #{whole_blended_trigger.1} parent=0 // loop_pre_header
    _
  $region3: #{whole_blended_trigger.1} parent=0 // loop_header
    %s8 = sphi 0, %s12
    %p9 = scmp.ge.s32.totalorder %s8, 4
    %s15 = sphi 0, %s27
    %s16 = sphi 0, %s23
    %s17 = sphi 0, %s15
    %s18 = sphi 0, %s16
    %s19 = sphi 0, %s17
    %s20 = sphi 0, %s18
    %s32 = sphi 0, %s34
    %s35 = sphi 0, %s32
    %s36 = sphi 0, %s35
    %s52 = sphi 0, %s36
    %s58 = sphi 0, %s60
    %s61 = sphi 0, %s58
    %s62 = sphi 0, %s61
    %s78 = sphi 0, %s62
    %s86 = sphi 0, %s88
    %s89 = sphi 0, %s86
    %s90 = sphi 0, %s89
    %s106 = sphi 0, %s90
  $region4: #{whole_blended_trigger.1} parent=0 // loop_header_branch
    %11 = sbr.rel (%p9) target = $region8
  $region5: #{whole_blended_trigger.1} parent=0 // loop_body
    %s13 = ssub.s32 %s8, 1
    %s14 = ssub.s32 %s8, 2
    %s21 = sadd.s32 1, %s16
    %p22 = scmp.ge.s32.totalorder %s21, 1
    %s23 = scalar_select %p22, 0, %s21
    %s24 = sadd.s32 1, %s15
    %s25 = scalar_select %p22, %s24, %s15
    %p26 = scmp.ge.s32.totalorder %s25, 2
    %s27 = scalar_select %p26, 0, %s25
    %s28 = ssub.s32 %s16, %s23
    %s29 = ssub.s32 %s15, %s27
    %s30 = sor.u32 %s28, %s29
    %p31 = scmp.eq.s32.totalorder %s30, 0
    %s33 = sadd.s32 %s32, 1
    %s34 = scalar_select %p31, %s32, %s33
    %p37 = pneg %p31
    %p38 = scmp.eq.s32.totalorder %s8, 1
    %p39 = por %p37, %p38
    %p40 = scmp.ne.s32.totalorder %s32, %s35
    %p41 = scmp.eq.s32.totalorder %s8, 0
    %p42 = por %p40, %p41
    %p43 = scmp.ne.s32.totalorder %s32, %s35
    %p44 = scmp.eq.s32.totalorder %s13, 1
    %p45 = por %p43, %p44
    %p46 = scmp.ne.s32.totalorder %s35, %s36
    %p47 = scmp.eq.s32.totalorder %s13, 0
    %p48 = por %p46, %p47
    %p49 = scmp.ne.s32.totalorder %s35, %s36
    %p50 = scmp.eq.s32.totalorder %s14, 1
    %p51 = por %p49, %p50
    %p53 = scmp.ne.s32.totalorder %s36, %s52
    %p54 = scmp.eq.s32.totalorder %s14, 0
    %p55 = por %p53, %p54
    %s56 = ssub.s32 %s15, %s27
    %p57 = scmp.eq.s32.totalorder %s56, 0
    %s59 = sadd.s32 %s58, 1
    %s60 = scalar_select %p57, %s58, %s59
    %p63 = pneg %p57
    %p64 = scmp.eq.s32.totalorder %s8, 1
    %p65 = por %p63, %p64
    %p66 = scmp.ne.s32.totalorder %s58, %s61
    %p67 = scmp.eq.s32.totalorder %s8, 0
    %p68 = por %p66, %p67
    %p69 = scmp.ne.s32.totalorder %s58, %s61
    %p70 = scmp.eq.s32.totalorder %s13, 1
    %p71 = por %p69, %p70
    %p72 = scmp.ne.s32.totalorder %s61, %s62
    %p73 = scmp.eq.s32.totalorder %s13, 0
    %p74 = por %p72, %p73
    %p75 = scmp.ne.s32.totalorder %s61, %s62
    %p76 = scmp.eq.s32.totalorder %s14, 1
    %p77 = por %p75, %p76
    %p79 = scmp.ne.s32.totalorder %s62, %s78
    %p80 = scmp.eq.s32.totalorder %s14, 0
    %p81 = por %p79, %p80
    %s82 = ssub.s32 %s16, %s23
    %s83 = ssub.s32 %s15, %s27
    %s84 = sor.u32 %s82, %s83
    %p85 = scmp.eq.s32.totalorder %s84, 0
    %s87 = sadd.s32 %s86, 1
    %s88 = scalar_select %p85, %s86, %s87
    %p91 = pneg %p85
    %p92 = scmp.eq.s32.totalorder %s8, 1
    %p93 = por %p91, %p92
    %p94 = scmp.ne.s32.totalorder %s86, %s89
    %p95 = scmp.eq.s32.totalorder %s8, 0
    %p96 = por %p94, %p95
    %p97 = scmp.ne.s32.totalorder %s86, %s89
    %p98 = scmp.eq.s32.totalorder %s13, 1
    %p99 = por %p97, %p98
    %p100 = scmp.ne.s32.totalorder %s89, %s90
    %p101 = scmp.eq.s32.totalorder %s13, 0
    %p102 = por %p100, %p101
    %p103 = scmp.ne.s32.totalorder %s89, %s90
    %p104 = scmp.eq.s32.totalorder %s14, 1
    %p105 = por %p103, %p104
    %p107 = scmp.ne.s32.totalorder %s90, %s106
    %p108 = scmp.eq.s32.totalorder %s14, 0
    %p109 = por %p107, %p108
    %p110 = scmp.le.s32.totalorder 1, %s8
    %p111 = scmp.lt.s32.totalorder %s8, 3
    %p112 = pnand %p110, %p111
    %p113 = pneg %p112
    // Predicated region
    $region9: #{whole_blended_trigger.1} parent=5 // pred_check
      _
    $region10: #{whole_blended_trigger.1} parent=5 // pred_check_branch
      %115 = sbr.rel (%p112) target = $region12
    $region11: #{whole_blended_trigger.1} parent=5 // pred_region
      %s116 = ssub.s32 %s8, 1
    $region12: #{whole_blended_trigger.1} parent=5 // pred_fallthru
      _
    %p117 = scmp.lt.s32.totalorder %s8, 2
    // Predicated region
    $region13: #{whole_blended_trigger.1} parent=5 // pred_check
      %p118 = pneg %p117
    $region14: #{whole_blended_trigger.1} parent=5 // pred_check_branch
      %120 = sbr.rel (%p118) target = $region16
    $region15: #{whole_blended_trigger.1} parent=5 // pred_region
      // Predicated region
      $region17: #{whole_blended_trigger.1} parent=15 // pred_check
        %p121 = pneg %p42
      $region18: #{whole_blended_trigger.1} parent=15 // pred_check_branch
        %123 = sbr.rel (%p121) target = $region20
      $region19: #{whole_blended_trigger.1} parent=15 // pred_region
        %s124 = smul.u32 3, %s15
        %p125 = scmp.lt.s32.totalorder %s16, 0
        %s126 = scalar_select %p125, %s16, 0
        %p127 = scmp.lt.s32.totalorder %s124, 5
        %s128 = scalar_select %p127, %s124, 5
        %s129 = smul.addr %s126, 6
        %s130 = sadd.s32 %s128, %s129
        %s131 = smul.addr %s130, 8
        %s132 = scalar_lea.vmem %s0, %s131
        %s133 = smul.u32 3, %s15
      $region20: #{whole_blended_trigger.1} parent=15 // pred_fallthru
        _
      // Predicated region
      $region21: #{whole_blended_trigger.1} parent=15 // pred_check
        %p134 = pneg %p68
      $region22: #{whole_blended_trigger.1} parent=15 // pred_check_branch
        %136 = sbr.rel (%p134) target = $region24
      $region23: #{whole_blended_trigger.1} parent=15 // pred_region
        %s137 = smul.u32 3, %s15
        %p138 = scmp.lt.s32.totalorder %s137, 5
        %s139 = scalar_select %p138, %s137, 5
        %s140 = scalar_lea.vmem %s1, %s139
        %s141 = smul.u32 3, %s15
      $region24: #{whole_blended_trigger.1} parent=15 // pred_fallthru
        _
    $region16: #{whole_blended_trigger.1} parent=5 // pred_fallthru
      _
    %p142 = scmp.le.s32.totalorder 1, %s8
    %p143 = scmp.lt.s32.totalorder %s8, 3
    %p144 = pnand %p142, %p143
    %p145 = pneg %p144
    // Predicated region
    $region25: #{whole_blended_trigger.1} parent=5 // pred_check
      _
    $region26: #{whole_blended_trigger.1} parent=5 // pred_check_branch
      %147 = sbr.rel (%p144) target = $region28
    $region27: #{whole_blended_trigger.1} parent=5 // pred_region
      %s148 = ssub.s32 %s8, 1
      %s149 = smul.u32 3, %s17
      %p150 = scmp.lt.s32.totalorder %s18, 0
      %s151 = scalar_select %p150, %s18, 0
      %p152 = scmp.lt.s32.totalorder %s149, 5
      %s153 = scalar_select %p152, %s149, 5
      %s154 = smul.addr %s151, 6
      %s155 = sadd.s32 %s153, %s154
      %s156 = smul.addr %s155, 8
      %s157 = scalar_lea.vmem %s0, %s156
      %p158 = pneg %p48
      %p159 = pneg %p45
      %s160 = smul.u32 3, %s17
      %p161 = scmp.lt.s32.totalorder %s160, 5
      %s162 = scalar_select %p161, %s160, 5
      %s163 = scalar_lea.vmem %s1, %s162
      %p164 = pneg %p74
      %p165 = pneg %p71
      %p166 = pneg %p102
      %p167 = pneg %p99
      %s168 = smul.u32 3, %s17
      %p169 = scmp.lt.s32.totalorder %s18, 0
      %s170 = scalar_select %p169, %s18, 0
      %p171 = scmp.lt.s32.totalorder %s168, 5
      %s172 = scalar_select %p171, %s168, 5
      %s173 = smul.addr %s170, 6
      %s174 = sadd.s32 %s172, %s173
      %s175 = smul.addr %s174, 8
      %s176 = scalar_lea.vmem %s2, %s175
      %s177 = smul.u32 3, %s17
      %p178 = scmp.lt.s32.totalorder %s18, 0
      %s179 = scalar_select %p178, %s18, 0
      %p180 = scmp.lt.s32.totalorder %s177, 5
      %s181 = scalar_select %p180, %s177, 5
      %s182 = smul.addr %s179, 6
      %s183 = sadd.s32 %s181, %s182
      %s184 = smul.addr %s183, 8
      %s185 = scalar_lea.vmem %s0, %s184
      %s186 = smul.u32 3, %s17
      %s187 = smul.u32 3, %s17
      %p188 = scmp.lt.s32.totalorder %s187, 5
      %s189 = scalar_select %p188, %s187, 5
      %s190 = scalar_lea.vmem %s1, %s189
      %s191 = smul.u32 3, %s17
      %s192 = smul.u32 3, %s17
      %p193 = scmp.lt.s32.totalorder %s18, 0
      %s194 = scalar_select %p193, %s18, 0
      %p195 = scmp.lt.s32.totalorder %s192, 5
      %s196 = scalar_select %p195, %s192, 5
      %s197 = smul.addr %s194, 6
      %s198 = sadd.s32 %s196, %s197
      %s199 = smul.addr %s198, 8
      %s200 = scalar_lea.vmem %s2, %s199
      %s201 = smul.u32 3, %s17
      %v202 = vld [vmem:[%s185] sm:$0xff]
      %v203 = vld [vmem:[%s185 + $0x8] sm:$0xff]
      %v204 = vld [vmem:[%s185 + $0x10] sm:$0xff]
      %v205 = vld [vmem:[%s190] sm:$0x7]
      %v207 = vlaneseq
      %v208 = vshrl.u32 %v207, 7
      %v209 = vsub.s32 0, %v208
      %v210 = vrot.slane %v205, %v209
      %v211 = vlaneseq
      %v212 = vshrl.u32 %v211, 7
      %v213 = vsub.s32 1, %v212
      %v214 = vrot.slane %v205, %v213
      %v215 = vlaneseq
      %v216 = vshrl.u32 %v215, 7
      %v217 = vsub.s32 2, %v216
      %v218 = vrot.slane %v205, %v217
      %v222 = vsub.f32 %v210, %v202
      %v223 = vsub.f32 %v214, %v203
      %v224 = vsub.f32 %v218, %v204
      %v225 = vmul.f32 %v222, 0.2
      %v226 = vmul.f32 %v223, 0.2
      %v227 = vmul.f32 %v224, 0.2
      %v228 = vadd.f32 %v202, %v225
      %v229 = vadd.f32 %v203, %v226
      %v230 = vadd.f32 %v204, %v227
      %231 = vst [vmem:[%s200] sm:$0xff] %v228
      %232 = vst [vmem:[%s200 + $0x8] sm:$0xff] %v229
      %233 = vst [vmem:[%s200 + $0x10] sm:$0xff] %v230
      %s234 = smul.u32 3, %s17
      %p235 = scmp.lt.s32.totalorder %s18, 0
      %s236 = scalar_select %p235, %s18, 0
      %p237 = scmp.lt.s32.totalorder %s234, 5
      %s238 = scalar_select %p237, %s234, 5
      %s239 = smul.addr %s236, 6
      %s240 = sadd.s32 %s238, %s239
      %s241 = smul.addr %s240, 8
      %s242 = scalar_lea.vmem %s2, %s241
      // Predicated region
      $region29: #{whole_blended_trigger.1} parent=27 // pred_check
        %p243 = pneg %p99
      $region30: #{whole_blended_trigger.1} parent=27 // pred_check_branch
        %245 = sbr.rel (%p243) target = $region32
      $region31: #{whole_blended_trigger.1} parent=27 // pred_region
        %s246 = smul.u32 3, %s17
      $region32: #{whole_blended_trigger.1} parent=27 // pred_fallthru
        _
    $region28: #{whole_blended_trigger.1} parent=5 // pred_fallthru
      _
    %p247 = scmp.le.s32.totalorder 2, %s8
    // Predicated region
    $region33: #{whole_blended_trigger.1} parent=5 // pred_check
      %p248 = pneg %p247
    $region34: #{whole_blended_trigger.1} parent=5 // pred_check_branch
      %250 = sbr.rel (%p248) target = $region36
    $region35: #{whole_blended_trigger.1} parent=5 // pred_region
      %s251 = ssub.s32 %s8, 2
      // Predicated region
      $region37: #{whole_blended_trigger.1} parent=35 // pred_check
        %p252 = pneg %p105
      $region38: #{whole_blended_trigger.1} parent=35 // pred_check_branch
        %254 = sbr.rel (%p252) target = $region40
      $region39: #{whole_blended_trigger.1} parent=35 // pred_region
        %s255 = smul.u32 3, %s19
        %p256 = scmp.lt.s32.totalorder %s20, 0
        %s257 = scalar_select %p256, %s20, 0
        %p258 = scmp.lt.s32.totalorder %s255, 5
        %s259 = scalar_select %p258, %s255, 5
        %s260 = smul.addr %s257, 6
        %s261 = sadd.s32 %s259, %s260
        %s262 = smul.addr %s261, 8
        %s263 = scalar_lea.vmem %s2, %s262
      $region40: #{whole_blended_trigger.1} parent=35 // pred_fallthru
        _
    $region36: #{whole_blended_trigger.1} parent=5 // pred_fallthru
      _
  $region6: #{whole_blended_trigger.1} parent=0 // loop_footer
    %s12 = sadd.s32 1, %s8
  $region7: #{whole_blended_trigger.1} parent=0 // loop_footer_branch
    %7 = sbr.rel target = $region3
  $region8: #{whole_blended_trigger.1} parent=0 // loop_exit
    _

</llo_original>
